<compile_context>
chip_gen: v5e
topology: v5e:2x2
jax: 0.10.0
libtpu: 0.0.40
codegen_flags: <defaults>
</compile_context>

<pallas_src>
import jax
import jax.numpy as jnp
from jax import lax
from jax.experimental import pallas as pl
from jax.experimental.pallas import tpu as pltpu

block_size = 16
dropout_ratio = 0.2          # eval mode -> identity
n_blocks = 2
n_embd = 32
n_heads = 2
head_size = n_embd // n_heads  # 16


def head_kernel(x_ref, w_ref, lp_ref, gp_ref, o_ref):
    # x_ref : (B*T, C)   flattened batch of inputs
    # w_ref : (C, 3*H)   fused [Wq*scale | Wk | Wv] (scale pre-folded into Q cols)
    # lp_ref: (3, H)     local positional biases (row 0 already scaled by 1/sqrt(H))
    # gp_ref: (T, H)     global positional embedding
    # o_ref : (T*B? no -> (B*T, H) lane-dense output
    BT, _ = x_ref.shape
    T, H = gp_ref.shape
    B = BT // T

    x = x_ref[...]
    w = w_ref[...]
    lp = lp_ref[...]
    gp = gp_ref[...]

    # Single fused projection matmul on the MXU: (B*T, C) @ (C, 3H).
    qkv = jnp.dot(x, w, preferred_element_type=jnp.float32)

    # Global positional bias tiled over the batch (B is tiny & static).
    gp_bt = jnp.concatenate([gp] * B, axis=0)            # (B*T, H)

    q = qkv[:, 0:H] + lp[0:1, :]                         # 1/sqrt(H) already folded in
    k = qkv[:, H:2 * H] + lp[1:2, :] + gp_bt
    v = qkv[:, 2 * H:3 * H] + lp[2:3, :] + gp_bt

    # Block-diagonal scores: one (B*T, H) x (B*T, H) -> (B*T, B*T) matmul.
    # 'qd,kd->qk' contracts last dims directly (no materialized k.T).
    att = jnp.einsum('qd,kd->qk', q, k, preferred_element_type=jnp.float32)

    # Combined mask: causal AND same-batch (block-diagonal).  T (= block_size)
    # is a power of two, so the batch id is a cheap VPU shift (no int divide).
    row = lax.broadcasted_iota(jnp.int32, (BT, BT), 0)
    col = lax.broadcasted_iota(jnp.int32, (BT, BT), 1)
    log2_t = T.bit_length() - 1
    mask = (row >= col) & ((row >> log2_t) == (col >> log2_t))
    neg_big = jnp.float32(-1e30)                         # large finite negative
    att = jnp.where(mask, att, neg_big)

    # Numerically-stable softmax with exact normalization (divide, not approx).
    att = att - jnp.max(att, axis=-1, keepdims=True)
    p = jnp.exp(att)
    p = p / jnp.sum(p, axis=-1, keepdims=True)
    # TODO(synk): training-mode dropout on `p` not implemented (eval semantics).

    # Weighted sum of values: (B*T, B*T) @ (B*T, H); off-block probs are exactly 0.
    o_ref[...] = jnp.dot(p, v, preferred_element_type=jnp.float32).astype(o_ref.dtype)


def head_forward(x, wqkv, local_pos, global_pos):
    """x: (B, T, C); wqkv: (C, 3*H) fused weight (scale folded); returns (B, T, H)."""
    B, T, C = x.shape
    H = wqkv.shape[1] // 3
    x_flat = x.reshape(B * T, C)                         # free row-major reshape

    out = pl.pallas_call(
        head_kernel,
        out_shape=jax.ShapeDtypeStruct((B * T, H), x.dtype),
        # Gridless call: whole arrays live in VMEM, no pipeline machinery.
        in_specs=[
            pl.BlockSpec(memory_space=pltpu.MemorySpace.VMEM),
            pl.BlockSpec(memory_space=pltpu.MemorySpace.VMEM),
            pl.BlockSpec(memory_space=pltpu.MemorySpace.VMEM),
            pl.BlockSpec(memory_space=pltpu.MemorySpace.VMEM),
        ],
        out_specs=pl.BlockSpec(memory_space=pltpu.MemorySpace.VMEM),
    )(x_flat, wqkv, local_pos, global_pos)
    return out.reshape(B, T, H)                          # free row-major reshape


def head_reference(x, wq, wk, wv, local_pos, global_pos):
    """Pure-JAX reference mirroring the PyTorch forward (eval mode)."""
    B, T, C = x.shape
    q = x @ wq + local_pos[0][None, None, :]
    k = x @ wk + local_pos[1][None, None, :] + global_pos[None, :, :]
    v = x @ wv + local_pos[2][None, None, :] + global_pos[None, :, :]
    att = (q @ jnp.swapaxes(k, -2, -1)) * (k.shape[-1] ** -0.5)
    tril = jnp.tril(jnp.ones((T, T)))
    att = jnp.where(tril == 0, -jnp.inf, att)
    att = jax.nn.softmax(att, axis=-1)
    return att @ v


if __name__ == "__main__":
    B, T, C, H = 2, block_size, n_embd, head_size

    key = jax.random.PRNGKey(0)
    kx, kq, kk, kv, klp, kgp = jax.random.split(key, 6)

    x = jax.random.normal(kx, (B, T, C), dtype=jnp.float32)

    # Linear weights stored as (n_embd, head_size), i.e. already transposed.
    w_std = (1.0 / C) ** 0.5
    wq = jax.random.normal(kq, (C, H), dtype=jnp.float32) * w_std
    wk = jax.random.normal(kk, (C, H), dtype=jnp.float32) * w_std
    wv = jax.random.normal(kv, (C, H), dtype=jnp.float32) * w_std

    # Positional embeddings: normal(0, 0.02 * (n_blocks * n_heads)**-0.5).
    pos_std = 0.02 * (n_blocks * n_heads) ** (-0.5)
    local_pos = jax.random.normal(klp, (3, H), dtype=jnp.float32) * pos_std
    global_pos = jax.random.normal(kgp, (block_size, H), dtype=jnp.float32) * pos_std

    # One-time weight transform (init-time, not per-call):
    #   * fuse [Wq | Wk | Wv] into a single (C, 3*H) MXU operand,
    #   * fold 1/sqrt(H) into the Q columns and the Q positional bias
    #     (scale is a power of two, so numerics are identical).
    scale = jnp.float32(H) ** -0.5
    wqkv = jnp.concatenate([wq * scale, wk, wv], axis=1)
    local_pos_folded = local_pos.at[0].multiply(scale)

    out = head_forward(x, wqkv, local_pos_folded, global_pos)
    out = jax.block_until_ready(out)

    ref = head_reference(x, wq, wk, wv, local_pos, global_pos)
    assert out.shape == (B, T, H)
    # Exact softmax normalization restored; residual slack only covers
    # default-precision MXU accumulation-order differences between the fused
    # kernel and the batched pure-JAX reference.
    assert jnp.allclose(out, ref, atol=1e-4, rtol=1e-4), "mismatch vs reference"

    print("KERNEL_OK")
</pallas_src>

<mosaic_0001>
module attributes {stable_mosaic.version = 11 : i64} {
  func.func @head_kernel(%arg0: memref<32x32xf32, #tpu.memory_space<vmem>>, %arg1: memref<32x48xf32, #tpu.memory_space<vmem>>, %arg2: memref<3x16xf32, #tpu.memory_space<vmem>>, %arg3: memref<16x16xf32, #tpu.memory_space<vmem>>, %arg4: memref<32x16xf32, #tpu.memory_space<vmem>>) attributes {dimension_semantics = [], scalar_prefetch = 0 : i64, scratch_operands = 0 : i64, tpu.core_type = #tpu.core_type<tc>} {
    %c0 = arith.constant 0 : index
    %c0_0 = arith.constant 0 : index
    %0 = vector.load %arg0[%c0, %c0_0] : memref<32x32xf32, #tpu.memory_space<vmem>>, vector<32x32xf32>
    %c0_1 = arith.constant 0 : index
    %c0_2 = arith.constant 0 : index
    %1 = vector.load %arg1[%c0_1, %c0_2] : memref<32x48xf32, #tpu.memory_space<vmem>>, vector<32x48xf32>
    %c0_3 = arith.constant 0 : index
    %c0_4 = arith.constant 0 : index
    %2 = vector.load %arg2[%c0_3, %c0_4] : memref<3x16xf32, #tpu.memory_space<vmem>>, vector<3x16xf32>
    %c0_5 = arith.constant 0 : index
    %c0_6 = arith.constant 0 : index
    %3 = vector.load %arg3[%c0_5, %c0_6] : memref<16x16xf32, #tpu.memory_space<vmem>>, vector<16x16xf32>
    %cst = arith.constant dense<0.000000e+00> : vector<32x48xf32>
    %4 = tpu.matmul %0, %1, %cst {dimension_numbers = #tpu.dot_dimension_numbers<[1], [0], [0], [1], [0, 0, 1, 1], [], []>} : vector<32x32xf32>, vector<32x48xf32>, vector<32x48xf32> -> vector<32x48xf32>
    %5 = tpu.concatenate %3, %3 in 0 : vector<16x16xf32>, vector<16x16xf32> -> vector<32x16xf32>
    %6 = vector.extract_strided_slice %4 {offsets = [0, 0], sizes = [32, 16], strides = [1, 1]} : vector<32x48xf32> to vector<32x16xf32>
    %7 = vector.extract_strided_slice %2 {offsets = [0, 0], sizes = [1, 16], strides = [1, 1]} : vector<3x16xf32> to vector<1x16xf32>
    %8 = vector.broadcast %7 : vector<1x16xf32> to vector<32x16xf32>
    %9 = arith.addf %6, %8 : vector<32x16xf32>
    %10 = vector.extract_strided_slice %4 {offsets = [0, 16], sizes = [32, 16], strides = [1, 1]} : vector<32x48xf32> to vector<32x16xf32>
    %11 = vector.extract_strided_slice %2 {offsets = [1, 0], sizes = [1, 16], strides = [1, 1]} : vector<3x16xf32> to vector<1x16xf32>
    %12 = vector.broadcast %11 : vector<1x16xf32> to vector<32x16xf32>
    %13 = arith.addf %10, %12 : vector<32x16xf32>
    %14 = arith.addf %13, %5 : vector<32x16xf32>
    %15 = vector.extract_strided_slice %4 {offsets = [0, 32], sizes = [32, 16], strides = [1, 1]} : vector<32x48xf32> to vector<32x16xf32>
    %16 = vector.extract_strided_slice %2 {offsets = [2, 0], sizes = [1, 16], strides = [1, 1]} : vector<3x16xf32> to vector<1x16xf32>
    %17 = vector.broadcast %16 : vector<1x16xf32> to vector<32x16xf32>
    %18 = arith.addf %15, %17 : vector<32x16xf32>
    %19 = arith.addf %18, %5 : vector<32x16xf32>
    "tpu.trace_start"() <{level = 10 : i32, message = "qd,kd->qk"}> : () -> ()
    %cst_7 = arith.constant dense<0.000000e+00> : vector<32x32xf32>
    %20 = tpu.matmul %9, %14, %cst_7 {dimension_numbers = #tpu.dot_dimension_numbers<[1], [1], [0], [0], [0, 0, 1, 0], [], []>} : vector<32x16xf32>, vector<32x16xf32>, vector<32x32xf32> -> vector<32x32xf32>
    "tpu.trace_stop"() : () -> ()
    %21 = tpu.iota {dimensions = array<i32: 0>} : vector<32x32xi32>
    %22 = tpu.iota {dimensions = array<i32: 1>} : vector<32x32xi32>
    %23 = arith.cmpi sge, %21, %22 : vector<32x32xi32>
    %c4_i32 = arith.constant 4 : i32
    %24 = vector.broadcast %c4_i32 : i32 to vector<32x32xi32>
    %25 = arith.shrsi %21, %24 : vector<32x32xi32>
    %c4_i32_8 = arith.constant 4 : i32
    %26 = vector.broadcast %c4_i32_8 : i32 to vector<32x32xi32>
    %27 = arith.shrsi %22, %26 : vector<32x32xi32>
    %28 = arith.cmpi eq, %25, %27 : vector<32x32xi32>
    %29 = arith.andi %23, %28 : vector<32x32xi1>
    %cst_9 = arith.constant -1.000000e+30 : f32
    %30 = vector.broadcast %cst_9 : f32 to vector<32x32xf32>
    %31 = arith.select %29, %20, %30 : vector<32x32xi1>, vector<32x32xf32>
    %cst_10 = arith.constant dense<0xFF800000> : vector<32xf32>
    %32 = vector.multi_reduction <maximumf>, %31, %cst_10 [1] : vector<32x32xf32> to vector<32xf32>
    %33 = vector.shape_cast %32 : vector<32xf32> to vector<32x1xf32>
    %34 = vector.broadcast %33 : vector<32x1xf32> to vector<32x32xf32>
    %35 = arith.subf %31, %34 : vector<32x32xf32>
    %36 = math.exp %35 : vector<32x32xf32>
    %cst_11 = arith.constant dense<0.000000e+00> : vector<32xf32>
    %37 = vector.multi_reduction <add>, %36, %cst_11 [1] : vector<32x32xf32> to vector<32xf32>
    %38 = vector.shape_cast %37 : vector<32xf32> to vector<32x1xf32>
    %39 = vector.broadcast %38 : vector<32x1xf32> to vector<32x32xf32>
    %40 = arith.divf %36, %39 : vector<32x32xf32>
    %cst_12 = arith.constant dense<0.000000e+00> : vector<32x16xf32>
    %41 = tpu.matmul %40, %19, %cst_12 {dimension_numbers = #tpu.dot_dimension_numbers<[1], [0], [0], [1], [0, 0, 1, 1], [], []>} : vector<32x32xf32>, vector<32x16xf32>, vector<32x16xf32> -> vector<32x16xf32>
    %c0_13 = arith.constant 0 : index
    %c0_14 = arith.constant 0 : index
    %42 = vector.load %arg4[%c0_13, %c0_14] : memref<32x16xf32, #tpu.memory_space<vmem>>, vector<32x16xf32>
    tpu.vector_store %arg4[%c0_13, %c0_14], %41 {strides = array<i32>} : memref<32x16xf32, #tpu.memory_space<vmem>>, vector<32x16xf32>,
    return
  }
}

</mosaic_0001>

<llo_original>
// kernel: tpu_custom_call.1
$region0: #{tpu_custom_call.1}
  #allocation0 [shape = 'u32[]', space=smem, size = 0x4, offset = 0x4, fixed_abs, tag = 'smem constant byte address 0x4 - core index']
  #allocation1 [shape = 'u32[72,128]{1,0:T(1,128)}', space=vmem, size = 0x9000, scoped, tag = 'internal scratch']
  %s0 = inlined_call_operand.hbm [shape: f32[32,32], index: 0, kind: input, shape index: {}]
  %s1 = inlined_call_operand.hbm [shape: f32[32,48], index: 1, kind: input, shape index: {}]
  %s2 = inlined_call_operand.hbm [shape: f32[3,16], index: 2, kind: input, shape index: {}]
  %s3 = inlined_call_operand.hbm [shape: f32[16,16], index: 3, kind: input, shape index: {}]
  %s4 = inlined_call_operand.vmem [shape: f32[32,16], index: 4, kind: output, shape index: {}]
  %s5 = sld [smem:[#allocation0]]
  $region42: #{tpu_custom_call.1} parent=0
    _
  %s7 = ssub.s32 1, %s5
  %s8 = scalar_select 0, %s7, %s5
  $region1: #{tpu_custom_call.1} parent=0
    #allocation2 [shape = 'u8[16384]{0}', space=vmem, size = 0x4000, scoped, tag = 'input window, operand 0, single buffered']
    #allocation3 [shape = 's32[1]{0}', space=sflag, size = 0x4, scoped, tag = 'scoped memory for tpu_custom_call.1']
    #allocation4 [shape = 'u8[16384]{0}', space=vmem, size = 0x4000, scoped, tag = 'input window, operand 1, single buffered']
    #allocation5 [shape = 's32[1]{0}', space=sflag, size = 0x4, scoped, tag = 'scoped memory for tpu_custom_call.1']
    #allocation6 [shape = 'u8[2048]{0}', space=vmem, size = 0x800, scoped, tag = 'input window, operand 2, single buffered']
    #allocation7 [shape = 'u8[8192]{0}', space=vmem, size = 0x2000, scoped, tag = 'input window, operand 3, single buffered']
    #allocation8 [shape = 's32[1]{0}', space=sflag, size = 0x4, scoped, tag = 'scoped memory for tpu_custom_call.1']
    %9 = vsyncpa [#allocation3], 0
    %10 = vsyncpa [#allocation5], 0
    %11 = vsyncpa [#allocation8], 0
    // Predicated region
    $region2: #{tpu_custom_call.1} parent=1 // pred_check
      _
    $region3: #{tpu_custom_call.1} parent=1 // pred_check_branch
      %13 = sbr.rel (0) target = $region5
    $region4: #{tpu_custom_call.1} parent=1 // pred_region
      %15 = vsyncadd [#allocation3], 0
      %s16 = sshll.u32 %s0, 4
      %s17 = int_to_ptr.hbm [resolvable:$true] %s16
      %s18 = sshll.u32 [#allocation2], 4
      %s19 = int_to_ptr.vmem [resolvable:$true] %s18
      %24 = dma.hbm_to_vmem [thread:$0]  %s17, 512, %s19, [#allocation3], 128, 128, 8
    $region5: #{tpu_custom_call.1} parent=1 // pred_fallthru
      _
    // Predicated region
    $region6: #{tpu_custom_call.1} parent=1 // pred_check
      _
    $region7: #{tpu_custom_call.1} parent=1 // pred_check_branch
      %26 = sbr.rel (0) target = $region9
    $region8: #{tpu_custom_call.1} parent=1 // pred_region
      %28 = vsyncadd [#allocation5], 0
      %s29 = sshll.u32 %s1, 4
      %s30 = int_to_ptr.hbm [resolvable:$true] %s29
      %s31 = sshll.u32 [#allocation4], 4
      %s32 = int_to_ptr.vmem [resolvable:$true] %s31
      %37 = dma.hbm_to_vmem [thread:$0]  %s30, 512, %s32, [#allocation5], 128, 128, 8
    $region9: #{tpu_custom_call.1} parent=1 // pred_fallthru
      _
    // Predicated region
    $region10: #{tpu_custom_call.1} parent=1 // pred_check
      _
    $region11: #{tpu_custom_call.1} parent=1 // pred_check_branch
      %39 = sbr.rel (0) target = $region13
    $region12: #{tpu_custom_call.1} parent=1 // pred_region
      %41 = vsyncadd [#allocation5], 0
      %s43 = sshll.u32 %s2, 4
      %s44 = int_to_ptr.hbm [resolvable:$true] %s43
      %s45 = sshll.u32 [#allocation6], 4
      %s46 = int_to_ptr.vmem [resolvable:$true] %s45
      %48 = dma.hbm_to_vmem [thread:$0]  %s44, 64, %s46, [#allocation5]
    $region13: #{tpu_custom_call.1} parent=1 // pred_fallthru
      _
    // Predicated region
    $region14: #{tpu_custom_call.1} parent=1 // pred_check
      _
    $region15: #{tpu_custom_call.1} parent=1 // pred_check_branch
      %50 = sbr.rel (0) target = $region17
    $region16: #{tpu_custom_call.1} parent=1 // pred_region
      %52 = vsyncadd [#allocation8], 0
      %s53 = sshll.u32 %s3, 4
      %s54 = int_to_ptr.hbm [resolvable:$true] %s53
      %s55 = sshll.u32 [#allocation7], 4
      %s56 = int_to_ptr.vmem [resolvable:$true] %s55
      %61 = dma.hbm_to_vmem [thread:$0]  %s54, 256, %s56, [#allocation8], 128, 128, 8
    $region17: #{tpu_custom_call.1} parent=1 // pred_fallthru
      _
    // Predicated region
    $region18: #{tpu_custom_call.1} parent=1 // pred_check
      _
    $region19: #{tpu_custom_call.1} parent=1 // pred_check_branch
      %63 = sbr.rel (0) target = $region21
    $region20: #{tpu_custom_call.1} parent=1 // pred_region
      %65 = dma.done [#allocation3], 512
    $region21: #{tpu_custom_call.1} parent=1 // pred_fallthru
      _
    // Predicated region
    $region22: #{tpu_custom_call.1} parent=1 // pred_check
      _
    $region23: #{tpu_custom_call.1} parent=1 // pred_check_branch
      %67 = sbr.rel (0) target = $region25
    $region24: #{tpu_custom_call.1} parent=1 // pred_region
      %69 = dma.done [#allocation5], 512
    $region25: #{tpu_custom_call.1} parent=1 // pred_fallthru
      _
    // Predicated region
    $region26: #{tpu_custom_call.1} parent=1 // pred_check
      _
    $region27: #{tpu_custom_call.1} parent=1 // pred_check_branch
      %71 = sbr.rel (0) target = $region29
    $region28: #{tpu_custom_call.1} parent=1 // pred_region
      %73 = dma.done [#allocation5], 64
    $region29: #{tpu_custom_call.1} parent=1 // pred_fallthru
      _
    // Predicated region
    $region30: #{tpu_custom_call.1} parent=1 // pred_check
      _
    $region31: #{tpu_custom_call.1} parent=1 // pred_check_branch
      %75 = sbr.rel (0) target = $region33
    $region32: #{tpu_custom_call.1} parent=1 // pred_region
      %77 = dma.done [#allocation8], 256
    $region33: #{tpu_custom_call.1} parent=1 // pred_fallthru
      _
    %v78 = vld [vmem:[#allocation2] sm:$0xff]
    %v79 = vld [vmem:[#allocation2 + $0x8] sm:$0xff]
    %v80 = vld [vmem:[#allocation2 + $0x10] sm:$0xff]
    %v81 = vld [vmem:[#allocation2 + $0x18] sm:$0xff]
    %v82 = vld [vmem:[#allocation4] sm:$0xff]
    %v83 = vld [vmem:[#allocation4 + $0x8] sm:$0xff]
    %v84 = vld [vmem:[#allocation4 + $0x10] sm:$0xff]
    %v85 = vld [vmem:[#allocation4 + $0x18] sm:$0xff]
    %v86 = vld [vmem:[#allocation6] sm:$0x7]
    %v87 = vld [vmem:[#allocation7] sm:$0xff]
    %v88 = vld [vmem:[#allocation7 + $0x8] sm:$0xff]
    %vm89 = vcmask 261120
    %v91 = vsel %vm89, %v78, 0
    %v94 = vsel %vm89, %v79, 0
    %v97 = vsel %vm89, %v80, 0
    %v100 = vsel %vm89, %v81, 0
    %102 = vmatpush.msra.mxu0 0.0
    %103 = vmatpush.msra.mxu0 0.0
    %104 = vmatpush.msra.mxu0 0.0
    %105 = vmatpush.msra.mxu0 0.0
    %106 = vmatpush.msra.mxu0 0.0
    %107 = vmatpush.msra.mxu0 0.0
    %108 = vmatpush.msra.mxu0 0.0
    %109 = vmatpush.msra.mxu0 0.0
    %110 = vmatpush.msra.mxu0 0.0
    %111 = vmatpush.msra.mxu0 0.0
    %112 = vmatpush.msra.mxu0 0.0
    %113 = vmatpush.msra.mxu0 0.0
    %114 = vmatpush.msra.mxu0 %v85
    %115 = vmatpush.msra.mxu0 %v84
    %116 = vmatpush.msra.mxu0 %v83
    %117 = vmatpush.msra.mxu0 %v82
    %118 = vmatmul.f32.gmra.mxu0 %v91
    %v119 = vpop.f32.mrf.mxu0
    %v120 = vadd.f32 0.0, %v119
    %121 = vmatmul.f32.gmra.mxu0 %v94
    %v122 = vpop.f32.mrf.mxu0
    %v123 = vadd.f32 0.0, %v122
    %124 = vmatmul.f32.gmra.mxu0 %v97
    %v125 = vpop.f32.mrf.mxu0
    %v126 = vadd.f32 0.0, %v125
    %127 = vmatmul.f32.gmra.mxu0 %v100
    %v128 = vpop.f32.mrf.mxu0
    %v129 = vadd.f32 0.0, %v128
    %130 = vdwg.mxu0
    %v131 = vperm.slane %v86, 0
    %v132 = vadd.f32 %v120, %v131
    %v133 = vadd.f32 %v123, %v131
    %v134 = vadd.f32 %v126, %v131
    %v135 = vadd.f32 %v129, %v131
    %v136 = vperm.slane %v86, 1
    %138 = vrot.lane.b32.xlu0 %v136, 16
    %v139 = vpop.permute.xlu0 %138
    %v141 = vadd.f32 %v120, %v139
    %v142 = vadd.f32 %v123, %v139
    %v143 = vadd.f32 %v126, %v139
    %v144 = vadd.f32 %v129, %v139
    %147 = vrot.lane.b32.xlu0 %v87, 16
    %v148 = vpop.permute.xlu0 %147
    %149 = vrot.lane.b32.xlu0 %v88, 16
    %v150 = vpop.permute.xlu0 %149
    %v153 = vadd.f32 %v141, %v148
    %v154 = vadd.f32 %v142, %v150
    %v155 = vadd.f32 %v143, %v148
    %v156 = vadd.f32 %v144, %v150
    %v157 = vperm.slane %v86, 2
    %159 = vrot.lane.b32.xlu0 %v157, 32
    %v160 = vpop.permute.xlu0 %159
    %v162 = vadd.f32 %v120, %v160
    %v163 = vadd.f32 %v123, %v160
    %v164 = vadd.f32 %v126, %v160
    %v165 = vadd.f32 %v129, %v160
    %166 = vrot.lane.b32.xlu0 %v87, 32
    %v167 = vpop.permute.xlu0 %166
    %168 = vrot.lane.b32.xlu0 %v88, 32
    %v169 = vpop.permute.xlu0 %168
    %v172 = vadd.f32 %v162, %v167
    %v173 = vadd.f32 %v163, %v169
    %v174 = vadd.f32 %v164, %v167
    %v175 = vadd.f32 %v165, %v169
    %180 = vrot.lane.b32.xlu0 %v153, 112
    %v181 = vpop.permute.xlu0 %180
    %182 = vrot.lane.b32.xlu0 %v154, 112
    %v183 = vpop.permute.xlu0 %182
    %184 = vrot.lane.b32.xlu0 %v155, 112
    %v185 = vpop.permute.xlu0 %184
    %186 = vrot.lane.b32.xlu0 %v156, 112
    %v187 = vpop.permute.xlu0 %186
    %vm188 = vcmask 130048
    %v190 = vsel %vm188, %v132, 0
    %v193 = vsel %vm188, %v133, 0
    %v196 = vsel %vm188, %v134, 0
    %v199 = vsel %vm188, %v135, 0
    %v201 = vsel %vm188, %v181, 0
    %v203 = vsel %vm188, %v183, 0
    %v205 = vsel %vm188, %v185, 0
    %v207 = vsel %vm188, %v187, 0
    %209 = vmatpush.xpose.msra.mxu0 0.0
    %210 = vmatpush.xpose.msra.mxu0 0.0
    %211 = vmatpush.xpose.msra.mxu0 0.0
    %212 = vmatpush.xpose.msra.mxu0 0.0
    %213 = vmatpush.xpose.msra.mxu0 0.0
    %214 = vmatpush.xpose.msra.mxu0 0.0
    %215 = vmatpush.xpose.msra.mxu0 0.0
    %216 = vmatpush.xpose.msra.mxu0 0.0
    %217 = vmatpush.xpose.msra.mxu0 0.0
    %218 = vmatpush.xpose.msra.mxu0 0.0
    %219 = vmatpush.xpose.msra.mxu0 0.0
    %220 = vmatpush.xpose.msra.mxu0 0.0
    %221 = vmatpush.xpose.msra.mxu0 %v207
    %222 = vmatpush.xpose.msra.mxu0 %v205
    %223 = vmatpush.xpose.msra.mxu0 %v203
    %224 = vmatpush.xpose.msra.mxu0 %v201
    %225 = vmatmul.f32.gmra.mxu0 %v190
    %v226 = vpop.f32.mrf.mxu0
    %v227 = vadd.f32 0.0, %v226
    %228 = vmatmul.f32.gmra.mxu0 %v193
    %v229 = vpop.f32.mrf.mxu0
    %v230 = vadd.f32 0.0, %v229
    %231 = vmatmul.f32.gmra.mxu0 %v196
    %v232 = vpop.f32.mrf.mxu0
    %v233 = vadd.f32 0.0, %v232
    %234 = vmatmul.f32.gmra.mxu0 %v199
    %v235 = vpop.f32.mrf.mxu0
    %v236 = vadd.f32 0.0, %v235
    %237 = vdwg.mxu0
    %v238 = vlaneseq
    %v239 = vshrl.u32 %v238, 7
    %v240 = vadd.s32 %v239, 8
    %v241 = vadd.s32 %v239, 16
    %v242 = vadd.s32 %v239, 24
    %v243 = vlaneseq
    %v244 = vand.u32 %v243, 127
    %vm245 = vcmp.ge.s32.totalorder %v239, %v244
    %vm246 = vcmp.ge.s32.totalorder %v240, %v244
    %vm247 = vcmp.ge.s32.totalorder %v241, %v244
    %vm248 = vcmp.ge.s32.totalorder %v242, %v244
    %v249 = vshra.s32 %v239, 4
    %v250 = vshra.s32 %v240, 4
    %v251 = vshra.s32 %v241, 4
    %v252 = vshra.s32 %v242, 4
    %v253 = vshra.s32 %v244, 4
    %vm254 = vcmp.eq.s32.totalorder %v249, %v253
    %vm255 = vcmp.eq.s32.totalorder %v250, %v253
    %vm256 = vcmp.eq.s32.totalorder %v251, %v253
    %vm257 = vcmp.eq.s32.totalorder %v252, %v253
    %vm258 = vmand %vm245, %vm254
    %vm259 = vmand %vm246, %vm255
    %vm260 = vmand %vm247, %vm256
    %vm261 = vmand %vm248, %vm257
    %v262 = vsel %vm258, %v227, -1e+30
    %v263 = vsel %vm259, %v230, -1e+30
    %v264 = vsel %vm260, %v233, -1e+30
    %v265 = vsel %vm261, %v236, -1e+30
    %v266 = vsel %vm89, %v262, -inf
    %267 = vmax.xlane.f32.xlu0 %v266
    %v268 = vpop.xlane.xlu0 %267
    %v269 = vsel %vm89, %v263, -inf
    %270 = vmax.xlane.f32.xlu0 %v269
    %v271 = vpop.xlane.xlu0 %270
    %v272 = vsel %vm89, %v264, -inf
    %273 = vmax.xlane.f32.xlu0 %v272
    %v274 = vpop.xlane.xlu0 %273
    %v275 = vsel %vm89, %v265, -inf
    %276 = vmax.xlane.f32.xlu0 %v275
    %v277 = vpop.xlane.xlu0 %276
    %v278 = vsub.f32 %v262, %v268
    %v279 = vsub.f32 %v263, %v271
    %v280 = vsub.f32 %v264, %v274
    %v281 = vsub.f32 %v265, %v277
    %v282 = vmul.f32 %v278, 1.442695
    %v283 = vpow.pop %v282
    %v284 = vmul.f32 %v279, 1.442695
    %v285 = vpow.pop %v284
    %v286 = vmul.f32 %v280, 1.442695
    %v287 = vpow.pop %v286
    %v288 = vmul.f32 %v281, 1.442695
    %v289 = vpow.pop %v288
    %v290 = vsel %vm89, %v283, 0.0
    %291 = vadd.xlane.f32.xlu0 %v290
    %v292 = vpop.xlane.xlu0 %291
    %v293 = vsel %vm89, %v285, 0.0
    %294 = vadd.xlane.f32.xlu0 %v293
    %v295 = vpop.xlane.xlu0 %294
    %v296 = vsel %vm89, %v287, 0.0
    %297 = vadd.xlane.f32.xlu0 %v296
    %v298 = vpop.xlane.xlu0 %297
    %v299 = vsel %vm89, %v289, 0.0
    %300 = vadd.xlane.f32.xlu0 %v299
    %v301 = vpop.xlane.xlu0 %300
    %v302 = vrcp.pop %v292
    %v303 = vmul.f32 %v292, %v302
    %v304 = vsub.f32 1.0, %v303
    %v305 = vmul.f32 %v302, %v304
    %v306 = vadd.f32 %v302, %v305
    %vm307 = vweird.f32 %v292
    %vm308 = vweird.f32 %v302
    %vm309 = vmor %vm307, %vm308
    %v310 = vsel %vm309, %v302, %v306
    %v311 = vand.u32 2147483647, %v292
    %vm312 = vcmp.eq.f32.partialorder %v311, 8.507059e+37
    %v313 = vand.u32 %v292, 2147483648
    %v314 = vor.u32 1.1754944e-38, %v313
    %v315 = vsel %vm312, %v314, %v310
    %v316 = vmul.f32 %v283, %v315
    %v317 = vrcp.pop %v295
    %v318 = vmul.f32 %v295, %v317
    %v319 = vsub.f32 1.0, %v318
    %v320 = vmul.f32 %v317, %v319
    %v321 = vadd.f32 %v317, %v320
    %vm322 = vweird.f32 %v295
    %vm323 = vweird.f32 %v317
    %vm324 = vmor %vm322, %vm323
    %v325 = vsel %vm324, %v317, %v321
    %v326 = vand.u32 2147483647, %v295
    %vm327 = vcmp.eq.f32.partialorder %v326, 8.507059e+37
    %v328 = vand.u32 %v295, 2147483648
    %v329 = vor.u32 1.1754944e-38, %v328
    %v330 = vsel %vm327, %v329, %v325
    %v331 = vmul.f32 %v285, %v330
    %v332 = vrcp.pop %v298
    %v333 = vmul.f32 %v298, %v332
    %v334 = vsub.f32 1.0, %v333
    %v335 = vmul.f32 %v332, %v334
    %v336 = vadd.f32 %v332, %v335
    %vm337 = vweird.f32 %v298
    %vm338 = vweird.f32 %v332
    %vm339 = vmor %vm337, %vm338
    %v340 = vsel %vm339, %v332, %v336
    %v341 = vand.u32 2147483647, %v298
    %vm342 = vcmp.eq.f32.partialorder %v341, 8.507059e+37
    %v343 = vand.u32 %v298, 2147483648
    %v344 = vor.u32 1.1754944e-38, %v343
    %v345 = vsel %vm342, %v344, %v340
    %v346 = vmul.f32 %v287, %v345
    %v347 = vrcp.pop %v301
    %v348 = vmul.f32 %v301, %v347
    %v349 = vsub.f32 1.0, %v348
    %v350 = vmul.f32 %v347, %v349
    %v351 = vadd.f32 %v347, %v350
    %vm352 = vweird.f32 %v301
    %vm353 = vweird.f32 %v347
    %vm354 = vmor %vm352, %vm353
    %v355 = vsel %vm354, %v347, %v351
    %v356 = vand.u32 2147483647, %v301
    %vm357 = vcmp.eq.f32.partialorder %v356, 8.507059e+37
    %v358 = vand.u32 %v301, 2147483648
    %v359 = vor.u32 1.1754944e-38, %v358
    %v360 = vsel %vm357, %v359, %v355
    %v361 = vmul.f32 %v289, %v360
    %366 = vrot.lane.b32.xlu0 %v172, 96
    %v367 = vpop.permute.xlu0 %366
    %368 = vrot.lane.b32.xlu0 %v173, 96
    %v369 = vpop.permute.xlu0 %368
    %370 = vrot.lane.b32.xlu0 %v174, 96
    %v371 = vpop.permute.xlu0 %370
    %372 = vrot.lane.b32.xlu0 %v175, 96
    %v373 = vpop.permute.xlu0 %372
    %v379 = vsel %vm89, %v316, 0
    %v382 = vsel %vm89, %v331, 0
    %v385 = vsel %vm89, %v346, 0
    %v388 = vsel %vm89, %v361, 0
    %390 = vmatpush.msra.mxu0 0.0
    %391 = vmatpush.msra.mxu0 0.0
    %392 = vmatpush.msra.mxu0 0.0
    %393 = vmatpush.msra.mxu0 0.0
    %394 = vmatpush.msra.mxu0 0.0
    %395 = vmatpush.msra.mxu0 0.0
    %396 = vmatpush.msra.mxu0 0.0
    %397 = vmatpush.msra.mxu0 0.0
    %398 = vmatpush.msra.mxu0 0.0
    %399 = vmatpush.msra.mxu0 0.0
    %400 = vmatpush.msra.mxu0 0.0
    %401 = vmatpush.msra.mxu0 0.0
    %402 = vmatpush.msra.mxu0 %v373
    %403 = vmatpush.msra.mxu0 %v371
    %404 = vmatpush.msra.mxu0 %v369
    %405 = vmatpush.msra.mxu0 %v367
    %406 = vmatmul.f32.gmra.mxu0 %v379
    %v407 = vpop.f32.mrf.mxu0
    %v408 = vadd.f32 0.0, %v407
    %409 = vmatmul.f32.gmra.mxu0 %v382
    %v410 = vpop.f32.mrf.mxu0
    %v411 = vadd.f32 0.0, %v410
    %412 = vmatmul.f32.gmra.mxu0 %v385
    %v413 = vpop.f32.mrf.mxu0
    %v414 = vadd.f32 0.0, %v413
    %415 = vmatmul.f32.gmra.mxu0 %v388
    %v416 = vpop.f32.mrf.mxu0
    %v417 = vadd.f32 0.0, %v416
    %418 = vdwg.mxu0
    %419 = vst.msk [vmem:[%s4] sm:$0xff] %vm188, %v408
    %420 = vst.msk [vmem:[%s4 + $0x8] sm:$0xff] %vm188, %v411
    %421 = vst.msk [vmem:[%s4 + $0x10] sm:$0xff] %vm188, %v414
    %422 = vst.msk [vmem:[%s4 + $0x18] sm:$0xff] %vm188, %v417
    // Predicated region
    $region34: #{tpu_custom_call.1} parent=1 // pred_check
      _
    $region35: #{tpu_custom_call.1} parent=1 // pred_check_branch
      %424 = sbr.rel (0) target = $region37
    $region36: #{tpu_custom_call.1} parent=1 // pred_region
      _
    $region37: #{tpu_custom_call.1} parent=1 // pred_fallthru
      _
    // Predicated region
    $region38: #{tpu_custom_call.1} parent=1 // pred_check
      _
    $region39: #{tpu_custom_call.1} parent=1 // pred_check_branch
      %426 = sbr.rel (0) target = $region41
    $region40: #{tpu_custom_call.1} parent=1 // pred_region
      _
    $region41: #{tpu_custom_call.1} parent=1 // pred_fallthru
      _
    %427 = vsyncpa [#allocation3], 1
    %428 = vsyncpa [#allocation5], 1
    %429 = vsyncpa [#allocation8], 1

</llo_original>
